<compile_context>
chip_gen: v5e
topology: v5e:2x2
jax: 0.10.0
libtpu: 0.0.40
codegen_flags: <defaults>
</compile_context>

<pallas_src>
import jax
import jax.numpy as jnp
from jax.experimental import pallas as pl
from jax.experimental.pallas import tpu as pltpu

BN_EPS = 1e-5
DROPOUT_RATE = 0.3   # see TODO(synk) above: applied as identity
_LANE = 128


def _round_up(x, m):
    return (x + m - 1) // m * m


def _pick_tile(total, candidates):
    for c in candidates:
        if total % c == 0:
            return c
    return total


# --------------------------- Pallas kernels ---------------------------

def _mm_kernel(lhs_ref, w_ref, out_ref):
    """One fused-K (9*Cin) matmul tile: out = lhs @ w, f32 accumulation."""
    out_ref[...] = jnp.dot(lhs_ref[...], w_ref[...],
                           preferred_element_type=jnp.float32).astype(out_ref.dtype)


def _mm_stats_kernel(lhs_ref, w_ref, out_ref, stats_ref):
    """Same matmul tile, plus per-channel [sum, sum^2] of the conv output
    accumulated across the (innermost) M grid axis -> the next BatchNorm2d's
    training-mode batch statistics fall out of the epilogue for free."""
    h = jnp.dot(lhs_ref[...], w_ref[...], preferred_element_type=jnp.float32)
    out_ref[...] = h.astype(out_ref.dtype)

    @pl.when(pl.program_id(1) == 0)       # first M tile of this Cout tile
    def _init():
        stats_ref[...] = jnp.zeros_like(stats_ref)

    s1 = jnp.sum(h, axis=0, keepdims=True)        # (1, tile_co)
    s2 = jnp.sum(h * h, axis=0, keepdims=True)    # (1, tile_co)
    stats_ref[...] += jnp.concatenate([s1, s2], axis=0)


# --------------------------- conv wrapper ---------------------------

def _conv3x3_same(act_nhwc, w_oihw, *, with_stats):
    """3x3, stride 1, pad 1, no-bias conv as a tiled Pallas matmul.

    act_nhwc : (N, H, W, Cin) f32 activation (already BN+ReLU'd; zero padding is
               applied *after* the activation, matching nn.Conv2d(padding=1)).
    w_oihw   : (Cout, Cin, 3, 3) conv weight.
    Returns the (N, H, W, Cout) f32 conv output, plus a (2, Cout) f32
    [sum, sum^2]-per-output-channel array if with_stats.
    """
    N, H, W, Ci = act_nhwc.shape
    Co = w_oihw.shape[0]
    M, K = N * H * W, 9 * Ci
    Kp, Cop = _round_up(K, _LANE), _round_up(Co, _LANE)

    # Weights: OIHW -> HWIO -> fold the 9 taps into the contraction: (9*Cin, Cout).
    w = jnp.transpose(w_oihw, (2, 3, 1, 0)).reshape(K, Co)
    w = jnp.pad(w, ((0, Kp - K), (0, Cop - Co))).astype(jnp.bfloat16)

    # im2col (wrapper glue, per the review's sanctioned option): lane-contiguous
    # (M, 9*Cin) bf16 LHS slab; tap order matches the weight fold above.
    a = act_nhwc.astype(jnp.bfloat16)
    a = jnp.pad(a, ((0, 0), (1, 1), (1, 1), (0, 0)))
    taps = [a[:, ky:ky + H, kx:kx + W, :] for ky in range(3) for kx in range(3)]
    lhs = jnp.stack(taps, axis=3).reshape(M, K)
    lhs = jnp.pad(lhs, ((0, 0), (0, Kp - K)))

    tile_m = _pick_tile(M, (256, 128, 64, 32, 16, 8))
    tile_co = 256 if Cop % 256 == 0 else _LANE
    grid = (Cop // tile_co, M // tile_m)   # Cout tiles outer, M tiles inner:
                                           # weight block resident across the M sweep.

    in_specs = [
        pl.BlockSpec((tile_m, Kp), lambda co, m: (m, 0)),
        pl.BlockSpec((Kp, tile_co), lambda co, m: (0, co)),
    ]
    out_spec_h = pl.BlockSpec((tile_m, tile_co), lambda co, m: (m, co))

    if with_stats:
        h, stats = pl.pallas_call(
            _mm_stats_kernel,
            out_shape=(jax.ShapeDtypeStruct((M, Cop), jnp.float32),
                       jax.ShapeDtypeStruct((2, Cop), jnp.float32)),
            grid=grid,
            in_specs=in_specs,
            out_specs=(out_spec_h,
                       pl.BlockSpec((2, tile_co), lambda co, m: (0, co))),
            compiler_params=pltpu.CompilerParams(
                dimension_semantics=("parallel", "arbitrary"),
                vmem_limit_bytes=32 * 1024 * 1024),
        )(lhs, w)
        return h[:, :Co].reshape(N, H, W, Co), stats[:, :Co]

    h = pl.pallas_call(
        _mm_kernel,
        out_shape=jax.ShapeDtypeStruct((M, Cop), jnp.float32),
        grid=grid,
        in_specs=in_specs,
        out_specs=out_spec_h,
        compiler_params=pltpu.CompilerParams(
            dimension_semantics=("parallel", "parallel"),
            vmem_limit_bytes=32 * 1024 * 1024),
    )(lhs, w)
    return h[:, :Co].reshape(N, H, W, Co)


# --------------------------- block forward ---------------------------

def _bn_affine(gamma, beta, mean, var):
    scale = gamma * jax.lax.rsqrt(var + BN_EPS)
    return scale, beta - mean * scale


def bottleneck_block(x_nchw, w1, g1, b1, w2, g2, b2):
    """BottleneckBlock forward (training-mode BN batch stats, dropout=identity).
    x: (N, Cin, H, W) -> (N, Cin + Cout, H, W)."""
    N, Cin, H, W = x_nchw.shape
    M = N * H * W
    x = jnp.transpose(x_nchw, (0, 2, 3, 1)).astype(jnp.float32)   # NHWC

    # bn1 + relu (per-channel batch stats over the raw input; tiny wrapper glue).
    mean1 = jnp.mean(x, axis=(0, 1, 2))
    var1 = jnp.mean(jnp.square(x - mean1), axis=(0, 1, 2))        # biased, BN training
    s1, t1 = _bn_affine(g1.astype(jnp.float32), b1.astype(jnp.float32), mean1, var1)
    a1 = jnp.maximum(x * s1 + t1, 0.0)

    # conv1 (+ fused accumulation of bn2's batch statistics in the kernel epilogue).
    h1, stats = _conv3x3_same(a1, w1, with_stats=True)

    # TODO(synk): F.dropout(p=0.3, training=True) between conv1 and bn2 is stochastic
    #             and is applied as identity, so bn2's stats are those of the
    #             un-dropped conv1 output.

    mean2 = stats[0] / M
    var2 = jnp.maximum(stats[1] / M - mean2 * mean2, 0.0)          # biased
    s2, t2 = _bn_affine(g2.astype(jnp.float32), b2.astype(jnp.float32), mean2, var2)
    a2 = jnp.maximum(h1 * s2 + t2, 0.0)

    # conv2 (dropout after it is identity as well).
    out = _conv3x3_same(a2, w2, with_stats=False)

    # torch.cat([x, out], dim=1)
    out_nchw = jnp.transpose(out, (0, 3, 1, 2))
    return jnp.concatenate([x_nchw.astype(jnp.float32), out_nchw], axis=1)


# --------------------------- pure-JAX reference ---------------------------

def reference(x_nchw, w1, g1, b1, w2, g2, b2):
    """Pure-JAX reference with identical semantics and the same bf16 matmul operands
    (f32 accumulation), so differences isolate kernel implementation errors."""
    x = jnp.transpose(x_nchw, (0, 2, 3, 1)).astype(jnp.float32)

    def bn_relu(t, g, b):
        m = jnp.mean(t, axis=(0, 1, 2))
        v = jnp.mean(jnp.square(t - m), axis=(0, 1, 2))            # biased
        return jnp.maximum((t - m) * jax.lax.rsqrt(v + BN_EPS) * g + b, 0.0)

    def conv(t, w_oihw):
        return jax.lax.conv_general_dilated(
            t.astype(jnp.bfloat16),
            jnp.transpose(w_oihw, (2, 3, 1, 0)).astype(jnp.bfloat16),
            window_strides=(1, 1), padding=[(1, 1), (1, 1)],
            dimension_numbers=("NHWC", "HWIO", "NHWC"),
            preferred_element_type=jnp.float32)

    h1 = conv(bn_relu(x, g1, b1), w1)
    out = conv(bn_relu(h1, g2, b2), w2)
    return jnp.concatenate(
        [x_nchw.astype(jnp.float32), jnp.transpose(out, (0, 3, 1, 2))], axis=1)


if __name__ == "__main__":
    # Small shapes consistent with the module: in_planes=8, out_planes=16 -> inter=64.
    N, in_planes, H, W = 2, 8, 16, 16
    out_planes = 16
    inter_planes = 4 * out_planes

    key = jax.random.PRNGKey(0)
    kx, kw1, kw2, kg1, kb1, kg2, kb2 = jax.random.split(key, 7)

    x = jax.random.normal(kx, (N, in_planes, H, W), dtype=jnp.float32)
    w1 = jax.random.normal(kw1, (inter_planes, in_planes, 3, 3), dtype=jnp.float32) * 0.05
    w2 = jax.random.normal(kw2, (out_planes, inter_planes, 3, 3), dtype=jnp.float32) * 0.05
    # BatchNorm affine params, perturbed from the PyTorch defaults (gamma=1, beta=0)
    # so the affine path is actually exercised.
    g1 = 1.0 + 0.1 * jax.random.normal(kg1, (in_planes,), dtype=jnp.float32)
    b1 = 0.1 * jax.random.normal(kb1, (in_planes,), dtype=jnp.float32)
    g2 = 1.0 + 0.1 * jax.random.normal(kg2, (inter_planes,), dtype=jnp.float32)
    b2 = 0.1 * jax.random.normal(kb2, (inter_planes,), dtype=jnp.float32)

    out = jax.block_until_ready(bottleneck_block(x, w1, g1, b1, w2, g2, b2))
    ref = jax.block_until_ready(reference(x, w1, g1, b1, w2, g2, b2))

    assert out.shape == (N, in_planes + out_planes, H, W), out.shape
    max_err = float(jnp.max(jnp.abs(out - ref)))
    assert jnp.allclose(out, ref, rtol=1e-2, atol=1e-2), max_err

    print("KERNEL_OK")
</pallas_src>

<mosaic_0001>
module attributes {stable_mosaic.version = 11 : i64} {
  func.func @_mm_stats_kernel(%arg0: i32, %arg1: i32, %arg2: memref<256x128xbf16, #tpu.memory_space<vmem>>, %arg3: memref<128x128xbf16, #tpu.memory_space<vmem>>, %arg4: memref<256x128xf32, #tpu.memory_space<vmem>>, %arg5: memref<2x128xf32, #tpu.memory_space<vmem>>) attributes {dimension_semantics = [#tpu.dimension_semantics<parallel>, #tpu.dimension_semantics<arbitrary>], iteration_bounds = array<i64: 1, 2>, scalar_prefetch = 0 : i64, scratch_operands = 0 : i64, tpu.core_type = #tpu.core_type<tc>, window_params = [{transform_indices = @transform_0, window_bounds = array<i64: 256, 128>}, {transform_indices = @transform_1, window_bounds = array<i64: 128, 128>}, {transform_indices = @transform_2, window_bounds = array<i64: 256, 128>}, {transform_indices = @transform_3, window_bounds = array<i64: 2, 128>}]} {
    %c0 = arith.constant 0 : index
    %c0_0 = arith.constant 0 : index
    %0 = vector.load %arg2[%c0, %c0_0] : memref<256x128xbf16, #tpu.memory_space<vmem>>, vector<256x128xbf16>
    %c0_1 = arith.constant 0 : index
    %c0_2 = arith.constant 0 : index
    %1 = vector.load %arg3[%c0_1, %c0_2] : memref<128x128xbf16, #tpu.memory_space<vmem>>, vector<128x128xbf16>
    %cst = arith.constant dense<0.000000e+00> : vector<256x128xf32>
    %2 = tpu.matmul %0, %1, %cst {dimension_numbers = #tpu.dot_dimension_numbers<[1], [0], [0], [1], [0, 0, 1, 1], [], []>} : vector<256x128xbf16>, vector<128x128xbf16>, vector<256x128xf32> -> vector<256x128xf32>
    %c0_3 = arith.constant 0 : index
    %c0_4 = arith.constant 0 : index
    %3 = vector.load %arg4[%c0_3, %c0_4] : memref<256x128xf32, #tpu.memory_space<vmem>>, vector<256x128xf32>
    tpu.vector_store %arg4[%c0_3, %c0_4], %2 {strides = array<i32>} : memref<256x128xf32, #tpu.memory_space<vmem>>, vector<256x128xf32>,
    %c0_i32 = arith.constant 0 : i32
    %4 = arith.cmpi eq, %arg1, %c0_i32 : i32
    %5 = arith.extui %4 : i1 to i32
    %c0_i32_5 = arith.constant 0 : i32
    %6 = arith.cmpi ne, %5, %c0_i32_5 : i32
    scf.if %6 {
      %cst_12 = arith.constant 0.000000e+00 : f32
      %16 = vector.broadcast %cst_12 : f32 to vector<2x128xf32>
      %c0_13 = arith.constant 0 : index
      %c0_14 = arith.constant 0 : index
      %17 = vector.load %arg5[%c0_13, %c0_14] : memref<2x128xf32, #tpu.memory_space<vmem>>, vector<2x128xf32>
      tpu.vector_store %arg5[%c0_13, %c0_14], %16 {strides = array<i32>} : memref<2x128xf32, #tpu.memory_space<vmem>>, vector<2x128xf32>,
    } else {
    }
    %cst_6 = arith.constant dense<0.000000e+00> : vector<128xf32>
    %7 = vector.multi_reduction <add>, %2, %cst_6 [0] : vector<256x128xf32> to vector<128xf32>
    %8 = vector.shape_cast %7 : vector<128xf32> to vector<1x128xf32>
    %9 = arith.mulf %2, %2 : vector<256x128xf32>
    %cst_7 = arith.constant dense<0.000000e+00> : vector<128xf32>
    %10 = vector.multi_reduction <add>, %9, %cst_7 [0] : vector<256x128xf32> to vector<128xf32>
    %11 = vector.shape_cast %10 : vector<128xf32> to vector<1x128xf32>
    %c0_8 = arith.constant 0 : index
    %c0_9 = arith.constant 0 : index
    %12 = vector.load %arg5[%c0_8, %c0_9] : memref<2x128xf32, #tpu.memory_space<vmem>>, vector<2x128xf32>
    %13 = tpu.concatenate %8, %11 in 0 : vector<1x128xf32>, vector<1x128xf32> -> vector<2x128xf32>
    %14 = arith.addf %12, %13 : vector<2x128xf32>
    %c0_10 = arith.constant 0 : index
    %c0_11 = arith.constant 0 : index
    %15 = vector.load %arg5[%c0_10, %c0_11] : memref<2x128xf32, #tpu.memory_space<vmem>>, vector<2x128xf32>
    tpu.vector_store %arg5[%c0_10, %c0_11], %14 {strides = array<i32>} : memref<2x128xf32, #tpu.memory_space<vmem>>, vector<2x128xf32>,
    return
  }
  func.func @transform_0(%arg0: i32, %arg1: i32) -> (i32, i32) {
    %c0_i32 = arith.constant 0 : i32
    %c0_i32_0 = arith.constant 0 : i32
    return %arg1, %c0_i32 : i32, i32
  }
  func.func @transform_1(%arg0: i32, %arg1: i32) -> (i32, i32) {
    %c0_i32 = arith.constant 0 : i32
    %c0_i32_0 = arith.constant 0 : i32
    return %c0_i32, %arg0 : i32, i32
  }
  func.func @transform_2(%arg0: i32, %arg1: i32) -> (i32, i32) {
    %c0_i32 = arith.constant 0 : i32
    return %arg1, %arg0 : i32, i32
  }
  func.func @transform_3(%arg0: i32, %arg1: i32) -> (i32, i32) {
    %c0_i32 = arith.constant 0 : i32
    %c0_i32_0 = arith.constant 0 : i32
    return %c0_i32, %arg0 : i32, i32
  }
}

</mosaic_0001>

<llo_original>
// kernel: tpu_custom_call.1
$region0: #{tpu_custom_call.1}
  #allocation0 [shape = 'u32[]', space=smem, size = 0x4, offset = 0x4, fixed_abs, tag = 'smem constant byte address 0x4 - core index']
  #allocation1 [shape = 'u32[72,128]{1,0:T(1,128)}', space=vmem, size = 0x9000, scoped, tag = 'internal scratch']
  %s0 = inlined_call_operand.hbm [shape: bf16[512,128], index: 0, kind: input, shape index: {}]
  %s1 = inlined_call_operand.hbm [shape: bf16[128,128], index: 1, kind: input, shape index: {}]
  %s2 = inlined_call_operand.hbm [shape: f32[512,128], index: 2, kind: output, shape index: {0}]
  %s3 = inlined_call_operand.hbm [shape: f32[2,128], index: 3, kind: output, shape index: {1}]
  %4 = xla_tuple %s2, %s3
  %s5 = sld [smem:[#allocation0]]
  $region61: #{tpu_custom_call.1} parent=0
    _
  %s7 = ssub.s32 1, %s5
  %s8 = scalar_select 0, %s7, %s5
  $region1: #{tpu_custom_call.1} parent=0
    #allocation2 [shape = 'u8[131072]{0}', space=vmem, size = 0x20000, scoped, tag = 'input window, operand 0']
    #allocation3 [shape = 's32[2]{0}', space=sflag, size = 0x8, scoped, tag = 'scoped memory for tpu_custom_call.1']
    #allocation4 [shape = 's32[2]{0}', space=sflag, size = 0x8, scoped, tag = 'scoped memory for tpu_custom_call.1']
    #allocation5 [shape = 'u8[32768]{0}', space=vmem, size = 0x8000, scoped, tag = 'input window, operand 1, single buffered']
    #allocation6 [shape = 's32[1]{0}', space=sflag, size = 0x4, scoped, tag = 'scoped memory for tpu_custom_call.1']
    #allocation7 [shape = 'u8[262144]{0}', space=vmem, size = 0x40000, scoped, tag = 'output window, operand 0']
    #allocation8 [shape = 'u8[1024]{0}', space=vmem, size = 0x400, scoped, tag = 'output window, operand 1, single buffered']
    #allocation9 [shape = 's32[1]{0}', space=sflag, size = 0x4, scoped, tag = 'scoped memory for tpu_custom_call.1']
    %9 = vsyncpa [#allocation3], 0
    %s10 = scalar_lea.sflag [#allocation3], 1
    %11 = vsyncpa %s10, 0
    %12 = vsyncpa [#allocation6], 0
    %13 = vsyncpa [#allocation4], 0
    %s14 = scalar_lea.sflag [#allocation4], 1
    %15 = vsyncpa %s14, 0
    %16 = vsyncpa [#allocation9], 0
    loop: start=0, step=1, limit=4
    $region2: #{tpu_custom_call.1} parent=1 // loop_pre_header
      _
    $region3: #{tpu_custom_call.1} parent=1 // loop_header
      %s18 = sphi 0, %s22
      %p19 = scmp.ge.s32.totalorder %s18, 4
      %s25 = sphi 0, %s37
      %s26 = sphi 0, %s33
      %s27 = sphi 0, %s25
      %s28 = sphi 0, %s26
      %s29 = sphi 0, %s27
      %s30 = sphi 0, %s28
      %s40 = sphi 0, %s42
      %s43 = sphi 0, %s40
      %s44 = sphi 0, %s43
      %s60 = sphi 0, %s44
      %s66 = sphi 0, %s68
      %s69 = sphi 0, %s66
      %s70 = sphi 0, %s69
      %s86 = sphi 0, %s70
      %s94 = sphi 0, %s96
      %s97 = sphi 0, %s94
      %s98 = sphi 0, %s97
      %s114 = sphi 0, %s98
      %s120 = sphi 0, %s122
      %s123 = sphi 0, %s120
      %s124 = sphi 0, %s123
      %s140 = sphi 0, %s124
    $region4: #{tpu_custom_call.1} parent=1 // loop_header_branch
      %21 = sbr.rel (%p19) target = $region8
    $region5: #{tpu_custom_call.1} parent=1 // loop_body
      %s23 = ssub.s32 %s18, 1
      %s24 = ssub.s32 %s18, 2
      %s31 = sadd.s32 1, %s26
      %p32 = scmp.ge.s32.totalorder %s31, 2
      %s33 = scalar_select %p32, 0, %s31
      %s34 = sadd.s32 1, %s25
      %s35 = scalar_select %p32, %s34, %s25
      %p36 = scmp.ge.s32.totalorder %s35, 1
      %s37 = scalar_select %p36, 0, %s35
      %s38 = ssub.s32 %s26, %s33
      %p39 = scmp.eq.s32.totalorder %s38, 0
      %s41 = sadd.s32 %s40, 1
      %s42 = scalar_select %p39, %s40, %s41
      %p45 = pneg %p39
      %p46 = scmp.eq.s32.totalorder %s18, 1
      %p47 = por %p45, %p46
      %p48 = scmp.ne.s32.totalorder %s40, %s43
      %p49 = scmp.eq.s32.totalorder %s18, 0
      %p50 = por %p48, %p49
      %p51 = scmp.ne.s32.totalorder %s40, %s43
      %p52 = scmp.eq.s32.totalorder %s23, 1
      %p53 = por %p51, %p52
      %p54 = scmp.ne.s32.totalorder %s43, %s44
      %p55 = scmp.eq.s32.totalorder %s23, 0
      %p56 = por %p54, %p55
      %p57 = scmp.ne.s32.totalorder %s43, %s44
      %p58 = scmp.eq.s32.totalorder %s24, 1
      %p59 = por %p57, %p58
      %p61 = scmp.ne.s32.totalorder %s44, %s60
      %p62 = scmp.eq.s32.totalorder %s24, 0
      %p63 = por %p61, %p62
      %s64 = ssub.s32 %s25, %s37
      %p65 = scmp.eq.s32.totalorder %s64, 0
      %s67 = sadd.s32 %s66, 1
      %s68 = scalar_select %p65, %s66, %s67
      %p71 = pneg %p65
      %p72 = scmp.eq.s32.totalorder %s18, 1
      %p73 = por %p71, %p72
      %p74 = scmp.ne.s32.totalorder %s66, %s69
      %p75 = scmp.eq.s32.totalorder %s18, 0
      %p76 = por %p74, %p75
      %p77 = scmp.ne.s32.totalorder %s66, %s69
      %p78 = scmp.eq.s32.totalorder %s23, 1
      %p79 = por %p77, %p78
      %p80 = scmp.ne.s32.totalorder %s69, %s70
      %p81 = scmp.eq.s32.totalorder %s23, 0
      %p82 = por %p80, %p81
      %p83 = scmp.ne.s32.totalorder %s69, %s70
      %p84 = scmp.eq.s32.totalorder %s24, 1
      %p85 = por %p83, %p84
      %p87 = scmp.ne.s32.totalorder %s70, %s86
      %p88 = scmp.eq.s32.totalorder %s24, 0
      %p89 = por %p87, %p88
      %s90 = ssub.s32 %s26, %s33
      %s91 = ssub.s32 %s25, %s37
      %s92 = sor.u32 %s90, %s91
      %p93 = scmp.eq.s32.totalorder %s92, 0
      %s95 = sadd.s32 %s94, 1
      %s96 = scalar_select %p93, %s94, %s95
      %p99 = pneg %p93
      %p100 = scmp.eq.s32.totalorder %s18, 1
      %p101 = por %p99, %p100
      %p102 = scmp.ne.s32.totalorder %s94, %s97
      %p103 = scmp.eq.s32.totalorder %s18, 0
      %p104 = por %p102, %p103
      %p105 = scmp.ne.s32.totalorder %s94, %s97
      %p106 = scmp.eq.s32.totalorder %s23, 1
      %p107 = por %p105, %p106
      %p108 = scmp.ne.s32.totalorder %s97, %s98
      %p109 = scmp.eq.s32.totalorder %s23, 0
      %p110 = por %p108, %p109
      %p111 = scmp.ne.s32.totalorder %s97, %s98
      %p112 = scmp.eq.s32.totalorder %s24, 1
      %p113 = por %p111, %p112
      %p115 = scmp.ne.s32.totalorder %s98, %s114
      %p116 = scmp.eq.s32.totalorder %s24, 0
      %p117 = por %p115, %p116
      %s118 = ssub.s32 %s25, %s37
      %p119 = scmp.eq.s32.totalorder %s118, 0
      %s121 = sadd.s32 %s120, 1
      %s122 = scalar_select %p119, %s120, %s121
      %p125 = pneg %p119
      %p126 = scmp.eq.s32.totalorder %s18, 1
      %p127 = por %p125, %p126
      %p128 = scmp.ne.s32.totalorder %s120, %s123
      %p129 = scmp.eq.s32.totalorder %s18, 0
      %p130 = por %p128, %p129
      %p131 = scmp.ne.s32.totalorder %s120, %s123
      %p132 = scmp.eq.s32.totalorder %s23, 1
      %p133 = por %p131, %p132
      %p134 = scmp.ne.s32.totalorder %s123, %s124
      %p135 = scmp.eq.s32.totalorder %s23, 0
      %p136 = por %p134, %p135
      %p137 = scmp.ne.s32.totalorder %s123, %s124
      %p138 = scmp.eq.s32.totalorder %s24, 1
      %p139 = por %p137, %p138
      %p141 = scmp.ne.s32.totalorder %s124, %s140
      %p142 = scmp.eq.s32.totalorder %s24, 0
      %p143 = por %p141, %p142
      %p144 = scmp.le.s32.totalorder 1, %s18
      %p145 = scmp.lt.s32.totalorder %s18, 3
      %p146 = pnand %p144, %p145
      %p147 = pneg %p146
      // Predicated region
      $region9: #{tpu_custom_call.1} parent=5 // pred_check
        _
      $region10: #{tpu_custom_call.1} parent=5 // pred_check_branch
        %149 = sbr.rel (%p146) target = $region12
      $region11: #{tpu_custom_call.1} parent=5 // pred_region
        %s150 = ssub.s32 %s18, 1
        // Predicated region
        $region13: #{tpu_custom_call.1} parent=11 // pred_check
          %p151 = pneg %p82
        $region14: #{tpu_custom_call.1} parent=11 // pred_check_branch
          %153 = sbr.rel (%p151) target = $region16
        $region15: #{tpu_custom_call.1} parent=11 // pred_region
          %155 = vsyncadd [#allocation6], 0
          %s156 = smul.addr %s27, 4
          %s157 = scalar_lea.hbm %s1, %s156
          %s158 = sshll.u32 %s157, 4
          %s159 = int_to_ptr.hbm [resolvable:$true] %s158
          %s160 = sshll.u32 [#allocation5], 4
          %s161 = int_to_ptr.vmem [resolvable:$true] %s160
          %166 = dma.hbm_to_vmem [thread:$0]  %s159, 1024, %s161, [#allocation6], 64, 64, 4
        $region16: #{tpu_custom_call.1} parent=11 // pred_fallthru
          _
      $region12: #{tpu_custom_call.1} parent=5 // pred_fallthru
        _
      %p167 = scmp.lt.s32.totalorder %s18, 2
      // Predicated region
      $region17: #{tpu_custom_call.1} parent=5 // pred_check
        %p168 = pneg %p167
      $region18: #{tpu_custom_call.1} parent=5 // pred_check_branch
        %170 = sbr.rel (%p168) target = $region20
      $region19: #{tpu_custom_call.1} parent=5 // pred_region
        // Predicated region
        $region21: #{tpu_custom_call.1} parent=19 // pred_check
          %p171 = pneg %p50
        $region22: #{tpu_custom_call.1} parent=19 // pred_check_branch
          %173 = sbr.rel (%p171) target = $region24
        $region23: #{tpu_custom_call.1} parent=19 // pred_region
          %s174 = sand.u32 %s40, 1
          %s175 = scalar_lea.sflag [#allocation3], %s174
          %s176 = sand.u32 %s40, 1
          %s177 = smul.addr %s176, 128
          %s178 = scalar_lea.vmem [#allocation2], %s177
          %s179 = smul.u32 32, %s26
          %181 = vsyncadd %s175, 0
          %s182 = smul.addr %s179, 4
          %s183 = scalar_lea.hbm %s0, %s182
          %s184 = sshll.u32 %s183, 4
          %s185 = int_to_ptr.hbm [resolvable:$true] %s184
          %s186 = sshll.u32 %s178, 4
          %s187 = int_to_ptr.vmem [resolvable:$true] %s186
          %192 = dma.hbm_to_vmem [thread:$0]  %s185, 2048, %s187, %s175, 64, 64, 4
        $region24: #{tpu_custom_call.1} parent=19 // pred_fallthru
          _
      $region20: #{tpu_custom_call.1} parent=5 // pred_fallthru
        _
      %p193 = scmp.le.s32.totalorder 1, %s18
      %p194 = scmp.lt.s32.totalorder %s18, 3
      %p195 = pnand %p193, %p194
      %p196 = pneg %p195
      // Predicated region
      $region25: #{tpu_custom_call.1} parent=5 // pred_check
        _
      $region26: #{tpu_custom_call.1} parent=5 // pred_check_branch
        %198 = sbr.rel (%p195) target = $region28
      $region27: #{tpu_custom_call.1} parent=5 // pred_region
        %s199 = ssub.s32 %s18, 1
        %s200 = sand.u32 %s43, 1
        %s201 = scalar_lea.sflag [#allocation3], %s200
        %s202 = sand.u32 %s43, 1
        %s203 = smul.addr %s202, 128
        %s204 = scalar_lea.vmem [#allocation2], %s203
        // Predicated region
        $region29: #{tpu_custom_call.1} parent=27 // pred_check
          %p205 = pneg %p56
        $region30: #{tpu_custom_call.1} parent=27 // pred_check_branch
          %207 = sbr.rel (%p205) target = $region32
        $region31: #{tpu_custom_call.1} parent=27 // pred_region
          %209 = dma.done %s201, 2048
        $region32: #{tpu_custom_call.1} parent=27 // pred_fallthru
          _
        // Predicated region
        $region33: #{tpu_custom_call.1} parent=27 // pred_check
          %p210 = pneg %p82
        $region34: #{tpu_custom_call.1} parent=27 // pred_check_branch
          %212 = sbr.rel (%p210) target = $region36
        $region35: #{tpu_custom_call.1} parent=27 // pred_region
          %214 = dma.done [#allocation6], 1024
        $region36: #{tpu_custom_call.1} parent=27 // pred_fallthru
          _
        %s215 = sand.u32 %s43, 1
        %s216 = scalar_lea.sflag [#allocation3], %s215
        %s217 = sand.u32 %s43, 1
        %s218 = smul.addr %s217, 128
        %s219 = scalar_lea.vmem [#allocation2], %s218
        %p220 = pneg %p56
        %p221 = pneg %p53
        %p222 = pneg %p82
        %p223 = pneg %p79
        %p224 = pneg %p110
        %p225 = pneg %p107
        %s226 = sand.u32 %s97, 1
        %s227 = scalar_lea.sflag [#allocation4], %s226
        %s228 = sand.u32 %s97, 1
        %s229 = smul.addr %s228, 256
        %s230 = scalar_lea.vmem [#allocation7], %s229
        %p231 = pneg %p136
        %p232 = pneg %p133
        %s233 = smul.u32 32, %s28
        %s234 = smul.u32 32, %s28
        %v235 = vld [vmem:[%s204] sm:$0xf]
        %v236 = vld [vmem:[%s204 + $0x4] sm:$0xf]
        %v237 = vld [vmem:[%s204 + $0x8] sm:$0xf]
        %v238 = vld [vmem:[%s204 + $0xc] sm:$0xf]
        %v239 = vld [vmem:[%s204 + $0x10] sm:$0xf]
        %v240 = vld [vmem:[%s204 + $0x14] sm:$0xf]
        %v241 = vld [vmem:[%s204 + $0x18] sm:$0xf]
        %v242 = vld [vmem:[%s204 + $0x1c] sm:$0xf]
        %v243 = vld [vmem:[%s204 + $0x20] sm:$0xf]
        %v244 = vld [vmem:[%s204 + $0x24] sm:$0xf]
        %v245 = vld [vmem:[%s204 + $0x28] sm:$0xf]
        %v246 = vld [vmem:[%s204 + $0x2c] sm:$0xf]
        %v247 = vld [vmem:[%s204 + $0x30] sm:$0xf]
        %v248 = vld [vmem:[%s204 + $0x34] sm:$0xf]
        %v249 = vld [vmem:[%s204 + $0x38] sm:$0xf]
        %v250 = vld [vmem:[%s204 + $0x3c] sm:$0xf]
        %v251 = vld [vmem:[%s204 + $0x40] sm:$0xf]
        %v252 = vld [vmem:[%s204 + $0x44] sm:$0xf]
        %v253 = vld [vmem:[%s204 + $0x48] sm:$0xf]
        %v254 = vld [vmem:[%s204 + $0x4c] sm:$0xf]
        %v255 = vld [vmem:[%s204 + $0x50] sm:$0xf]
        %v256 = vld [vmem:[%s204 + $0x54] sm:$0xf]
        %v257 = vld [vmem:[%s204 + $0x58] sm:$0xf]
        %v258 = vld [vmem:[%s204 + $0x5c] sm:$0xf]
        %v259 = vld [vmem:[%s204 + $0x60] sm:$0xf]
        %v260 = vld [vmem:[%s204 + $0x64] sm:$0xf]
        %v261 = vld [vmem:[%s204 + $0x68] sm:$0xf]
        %v262 = vld [vmem:[%s204 + $0x6c] sm:$0xf]
        %v263 = vld [vmem:[%s204 + $0x70] sm:$0xf]
        %v264 = vld [vmem:[%s204 + $0x74] sm:$0xf]
        %v265 = vld [vmem:[%s204 + $0x78] sm:$0xf]
        %v266 = vld [vmem:[%s204 + $0x7c] sm:$0xf]
        %v267 = vld [vmem:[#allocation5] sm:$0xf]
        %v268 = vld [vmem:[#allocation5 + $0x4] sm:$0xf]
        %v269 = vld [vmem:[#allocation5 + $0x8] sm:$0xf]
        %v270 = vld [vmem:[#allocation5 + $0xc] sm:$0xf]
        %v271 = vld [vmem:[#allocation5 + $0x10] sm:$0xf]
        %v272 = vld [vmem:[#allocation5 + $0x14] sm:$0xf]
        %v273 = vld [vmem:[#allocation5 + $0x18] sm:$0xf]
        %v274 = vld [vmem:[#allocation5 + $0x1c] sm:$0xf]
        %v275 = vld [vmem:[#allocation5 + $0x20] sm:$0xf]
        %v276 = vld [vmem:[#allocation5 + $0x24] sm:$0xf]
        %v277 = vld [vmem:[#allocation5 + $0x28] sm:$0xf]
        %v278 = vld [vmem:[#allocation5 + $0x2c] sm:$0xf]
        %v279 = vld [vmem:[#allocation5 + $0x30] sm:$0xf]
        %v280 = vld [vmem:[#allocation5 + $0x34] sm:$0xf]
        %v281 = vld [vmem:[#allocation5 + $0x38] sm:$0xf]
        %v282 = vld [vmem:[#allocation5 + $0x3c] sm:$0xf]
        %v315 = vunpack.c.l.b16 %v235
        %v316 = vunpack.c.l.b16 %v236
        %v317 = vunpack.c.l.b16 %v237
        %v318 = vunpack.c.l.b16 %v238
        %v319 = vunpack.c.l.b16 %v239
        %v320 = vunpack.c.l.b16 %v240
        %v321 = vunpack.c.l.b16 %v241
        %v322 = vunpack.c.l.b16 %v242
        %v323 = vunpack.c.l.b16 %v243
        %v324 = vunpack.c.l.b16 %v244
        %v325 = vunpack.c.l.b16 %v245
        %v326 = vunpack.c.l.b16 %v246
        %v327 = vunpack.c.l.b16 %v247
        %v328 = vunpack.c.l.b16 %v248
        %v329 = vunpack.c.l.b16 %v249
        %v330 = vunpack.c.l.b16 %v250
        %v331 = vunpack.c.l.b16 %v251
        %v332 = vunpack.c.l.b16 %v252
        %v333 = vunpack.c.l.b16 %v253
        %v334 = vunpack.c.l.b16 %v254
        %v335 = vunpack.c.l.b16 %v255
        %v336 = vunpack.c.l.b16 %v256
        %v337 = vunpack.c.l.b16 %v257
        %v338 = vunpack.c.l.b16 %v258
        %v339 = vunpack.c.l.b16 %v259
        %v340 = vunpack.c.l.b16 %v260
        %v341 = vunpack.c.l.b16 %v261
        %v342 = vunpack.c.l.b16 %v262
        %v343 = vunpack.c.l.b16 %v263
        %v344 = vunpack.c.l.b16 %v264
        %v345 = vunpack.c.l.b16 %v265
        %v346 = vunpack.c.l.b16 %v266
        %v347 = vpack.c.b16 %v316, %v315
        %v348 = vpack.c.b16 %v318, %v317
        %v349 = vpack.c.b16 %v320, %v319
        %v350 = vpack.c.b16 %v322, %v321
        %v351 = vpack.c.b16 %v324, %v323
        %v352 = vpack.c.b16 %v326, %v325
        %v353 = vpack.c.b16 %v328, %v327
        %v354 = vpack.c.b16 %v330, %v329
        %v355 = vpack.c.b16 %v332, %v331
        %v356 = vpack.c.b16 %v334, %v333
        %v357 = vpack.c.b16 %v336, %v335
        %v358 = vpack.c.b16 %v338, %v337
        %v359 = vpack.c.b16 %v340, %v339
        %v360 = vpack.c.b16 %v342, %v341
        %v361 = vpack.c.b16 %v344, %v343
        %v362 = vpack.c.b16 %v346, %v345
        %v395 = vunpack.c.l.b16 %v267
        %v396 = vunpack.c.l.b16 %v268
        %v397 = vunpack.c.l.b16 %v269
        %v398 = vunpack.c.l.b16 %v270
        %v399 = vunpack.c.l.b16 %v271
        %v400 = vunpack.c.l.b16 %v272
        %v401 = vunpack.c.l.b16 %v273
        %v402 = vunpack.c.l.b16 %v274
        %v403 = vunpack.c.l.b16 %v275
        %v404 = vunpack.c.l.b16 %v276
        %v405 = vunpack.c.l.b16 %v277
        %v406 = vunpack.c.l.b16 %v278
        %v407 = vunpack.c.l.b16 %v279
        %v408 = vunpack.c.l.b16 %v280
        %v409 = vunpack.c.l.b16 %v281
        %v410 = vunpack.c.l.b16 %v282
        %v411 = vpack.c.b16 %v396, %v395
        %v412 = vpack.c.b16 %v398, %v397
        %v413 = vpack.c.b16 %v400, %v399
        %v414 = vpack.c.b16 %v402, %v401
        %v415 = vpack.c.b16 %v404, %v403
        %v416 = vpack.c.b16 %v406, %v405
        %v417 = vpack.c.b16 %v408, %v407
        %v418 = vpack.c.b16 %v410, %v409
        %427 = vmatpush.bf16.msra.mxu0 %v418
        %428 = vmatpush.bf16.msra.mxu0 %v417
        %429 = vmatpush.bf16.msra.mxu0 %v416
        %430 = vmatpush.bf16.msra.mxu0 %v415
        %431 = vmatpush.bf16.msra.mxu0 %v414
        %432 = vmatpush.bf16.msra.mxu0 %v413
        %433 = vmatpush.bf16.msra.mxu0 %v412
        %434 = vmatpush.bf16.msra.mxu0 %v411
        %435 = vmatmul.bf16.gmra.mxu0 %v347
        %v436 = vpop.f32.mrf.mxu0
        %v437 = vadd.f32 0.0, %v436
        %v438 = vpop.f32.mrf.mxu0
        %v439 = vadd.f32 0.0, %v438
        %440 = vmatmul.bf16.gmra.mxu0 %v348
        %v441 = vpop.f32.mrf.mxu0
        %v442 = vadd.f32 0.0, %v441
        %v443 = vpop.f32.mrf.mxu0
        %v444 = vadd.f32 0.0, %v443
        %445 = vmatmul.bf16.gmra.mxu0 %v349
        %v446 = vpop.f32.mrf.mxu0
        %v447 = vadd.f32 0.0, %v446
        %v448 = vpop.f32.mrf.mxu0
        %v449 = vadd.f32 0.0, %v448
        %450 = vmatmul.bf16.gmra.mxu0 %v350
        %v451 = vpop.f32.mrf.mxu0
        %v452 = vadd.f32 0.0, %v451
        %v453 = vpop.f32.mrf.mxu0
        %v454 = vadd.f32 0.0, %v453
        %455 = vmatmul.bf16.gmra.mxu0 %v351
        %v456 = vpop.f32.mrf.mxu0
        %v457 = vadd.f32 0.0, %v456
        %v458 = vpop.f32.mrf.mxu0
        %v459 = vadd.f32 0.0, %v458
        %460 = vmatmul.bf16.gmra.mxu0 %v352
        %v461 = vpop.f32.mrf.mxu0
        %v462 = vadd.f32 0.0, %v461
        %v463 = vpop.f32.mrf.mxu0
        %v464 = vadd.f32 0.0, %v463
        %465 = vmatmul.bf16.gmra.mxu0 %v353
        %v466 = vpop.f32.mrf.mxu0
        %v467 = vadd.f32 0.0, %v466
        %v468 = vpop.f32.mrf.mxu0
        %v469 = vadd.f32 0.0, %v468
        %470 = vmatmul.bf16.gmra.mxu0 %v354
        %v471 = vpop.f32.mrf.mxu0
        %v472 = vadd.f32 0.0, %v471
        %v473 = vpop.f32.mrf.mxu0
        %v474 = vadd.f32 0.0, %v473
        %475 = vmatmul.bf16.gmra.mxu0 %v355
        %v476 = vpop.f32.mrf.mxu0
        %v477 = vadd.f32 0.0, %v476
        %v478 = vpop.f32.mrf.mxu0
        %v479 = vadd.f32 0.0, %v478
        %480 = vmatmul.bf16.gmra.mxu0 %v356
        %v481 = vpop.f32.mrf.mxu0
        %v482 = vadd.f32 0.0, %v481
        %v483 = vpop.f32.mrf.mxu0
        %v484 = vadd.f32 0.0, %v483
        %485 = vmatmul.bf16.gmra.mxu0 %v357
        %v486 = vpop.f32.mrf.mxu0
        %v487 = vadd.f32 0.0, %v486
        %v488 = vpop.f32.mrf.mxu0
        %v489 = vadd.f32 0.0, %v488
        %490 = vmatmul.bf16.gmra.mxu0 %v358
        %v491 = vpop.f32.mrf.mxu0
        %v492 = vadd.f32 0.0, %v491
        %v493 = vpop.f32.mrf.mxu0
        %v494 = vadd.f32 0.0, %v493
        %495 = vmatmul.bf16.gmra.mxu0 %v359
        %v496 = vpop.f32.mrf.mxu0
        %v497 = vadd.f32 0.0, %v496
        %v498 = vpop.f32.mrf.mxu0
        %v499 = vadd.f32 0.0, %v498
        %500 = vmatmul.bf16.gmra.mxu0 %v360
        %v501 = vpop.f32.mrf.mxu0
        %v502 = vadd.f32 0.0, %v501
        %v503 = vpop.f32.mrf.mxu0
        %v504 = vadd.f32 0.0, %v503
        %505 = vmatmul.bf16.gmra.mxu0 %v361
        %v506 = vpop.f32.mrf.mxu0
        %v507 = vadd.f32 0.0, %v506
        %v508 = vpop.f32.mrf.mxu0
        %v509 = vadd.f32 0.0, %v508
        %510 = vmatmul.bf16.gmra.mxu0 %v362
        %v511 = vpop.f32.mrf.mxu0
        %v512 = vadd.f32 0.0, %v511
        %v513 = vpop.f32.mrf.mxu0
        %v514 = vadd.f32 0.0, %v513
        %515 = vdwg.mxu0
        %516 = vst [vmem:[%s230] sm:$0xff] %v437
        %517 = vst [vmem:[%s230 + $0x8] sm:$0xff] %v439
        %518 = vst [vmem:[%s230 + $0x10] sm:$0xff] %v442
        %519 = vst [vmem:[%s230 + $0x18] sm:$0xff] %v444
        %520 = vst [vmem:[%s230 + $0x20] sm:$0xff] %v447
        %521 = vst [vmem:[%s230 + $0x28] sm:$0xff] %v449
        %522 = vst [vmem:[%s230 + $0x30] sm:$0xff] %v452
        %523 = vst [vmem:[%s230 + $0x38] sm:$0xff] %v454
        %524 = vst [vmem:[%s230 + $0x40] sm:$0xff] %v457
        %525 = vst [vmem:[%s230 + $0x48] sm:$0xff] %v459
        %526 = vst [vmem:[%s230 + $0x50] sm:$0xff] %v462
        %527 = vst [vmem:[%s230 + $0x58] sm:$0xff] %v464
        %528 = vst [vmem:[%s230 + $0x60] sm:$0xff] %v467
        %529 = vst [vmem:[%s230 + $0x68] sm:$0xff] %v469
        %530 = vst [vmem:[%s230 + $0x70] sm:$0xff] %v472
        %531 = vst [vmem:[%s230 + $0x78] sm:$0xff] %v474
        %532 = vst [vmem:[%s230 + $0x80] sm:$0xff] %v477
        %533 = vst [vmem:[%s230 + $0x88] sm:$0xff] %v479
        %534 = vst [vmem:[%s230 + $0x90] sm:$0xff] %v482
        %535 = vst [vmem:[%s230 + $0x98] sm:$0xff] %v484
        %536 = vst [vmem:[%s230 + $0xa0] sm:$0xff] %v487
        %537 = vst [vmem:[%s230 + $0xa8] sm:$0xff] %v489
        %538 = vst [vmem:[%s230 + $0xb0] sm:$0xff] %v492
        %539 = vst [vmem:[%s230 + $0xb8] sm:$0xff] %v494
        %540 = vst [vmem:[%s230 + $0xc0] sm:$0xff] %v497
        %541 = vst [vmem:[%s230 + $0xc8] sm:$0xff] %v499
        %542 = vst [vmem:[%s230 + $0xd0] sm:$0xff] %v502
        %543 = vst [vmem:[%s230 + $0xd8] sm:$0xff] %v504
        %544 = vst [vmem:[%s230 + $0xe0] sm:$0xff] %v507
        %545 = vst [vmem:[%s230 + $0xe8] sm:$0xff] %v509
        %546 = vst [vmem:[%s230 + $0xf0] sm:$0xff] %v512
        %547 = vst [vmem:[%s230 + $0xf8] sm:$0xff] %v514
        %p548 = scmp.eq.s32.totalorder %s28, 0
        // Predicated region
        $region37: #{tpu_custom_call.1} parent=27 // pred_check
          %p549 = pneg %p548
        $region38: #{tpu_custom_call.1} parent=27 // pred_check_branch
          %551 = sbr.rel (%p549) target = $region40
        $region39: #{tpu_custom_call.1} parent=27 // pred_region
          %552 = vst [vmem:[#allocation8] sm:$0x3] 0.0
        $region40: #{tpu_custom_call.1} parent=27 // pred_fallthru
          _
        %v553 = vadd.f32 %v437, %v439
        %v554 = vadd.f32 %v553, %v442
        %v555 = vadd.f32 %v554, %v444
        %v556 = vadd.f32 %v555, %v447
        %v557 = vadd.f32 %v556, %v449
        %v558 = vadd.f32 %v557, %v452
        %v559 = vadd.f32 %v558, %v454
        %v560 = vadd.f32 %v559, %v457
        %v561 = vadd.f32 %v560, %v459
        %v562 = vadd.f32 %v561, %v462
        %v563 = vadd.f32 %v562, %v464
        %v564 = vadd.f32 %v563, %v467
        %v565 = vadd.f32 %v564, %v469
        %v566 = vadd.f32 %v565, %v472
        %v567 = vadd.f32 %v566, %v474
        %v568 = vadd.f32 %v567, %v477
        %v569 = vadd.f32 %v568, %v479
        %v570 = vadd.f32 %v569, %v482
        %v571 = vadd.f32 %v570, %v484
        %v572 = vadd.f32 %v571, %v487
        %v573 = vadd.f32 %v572, %v489
        %v574 = vadd.f32 %v573, %v492
        %v575 = vadd.f32 %v574, %v494
        %v576 = vadd.f32 %v575, %v497
        %v577 = vadd.f32 %v576, %v499
        %v578 = vadd.f32 %v577, %v502
        %v579 = vadd.f32 %v578, %v504
        %v580 = vadd.f32 %v579, %v507
        %v581 = vadd.f32 %v580, %v509
        %v582 = vadd.f32 %v581, %v512
        %v583 = vadd.f32 %v582, %v514
        %v584 = vrot.slane %v583, 4
        %v585 = vadd.f32 %v583, %v584
        %v586 = vrot.slane %v585, 2
        %v587 = vadd.f32 %v585, %v586
        %v588 = vrot.slane %v587, 1
        %v589 = vadd.f32 %v587, %v588
        %v590 = vmul.f32 %v437, %v437
        %v591 = vmul.f32 %v439, %v439
        %v592 = vmul.f32 %v442, %v442
        %v593 = vmul.f32 %v444, %v444
        %v594 = vmul.f32 %v447, %v447
        %v595 = vmul.f32 %v449, %v449
        %v596 = vmul.f32 %v452, %v452
        %v597 = vmul.f32 %v454, %v454
        %v598 = vmul.f32 %v457, %v457
        %v599 = vmul.f32 %v459, %v459
        %v600 = vmul.f32 %v462, %v462
        %v601 = vmul.f32 %v464, %v464
        %v602 = vmul.f32 %v467, %v467
        %v603 = vmul.f32 %v469, %v469
        %v604 = vmul.f32 %v472, %v472
        %v605 = vmul.f32 %v474, %v474
        %v606 = vmul.f32 %v477, %v477
        %v607 = vmul.f32 %v479, %v479
        %v608 = vmul.f32 %v482, %v482
        %v609 = vmul.f32 %v484, %v484
        %v610 = vmul.f32 %v487, %v487
        %v611 = vmul.f32 %v489, %v489
        %v612 = vmul.f32 %v492, %v492
        %v613 = vmul.f32 %v494, %v494
        %v614 = vmul.f32 %v497, %v497
        %v615 = vmul.f32 %v499, %v499
        %v616 = vmul.f32 %v502, %v502
        %v617 = vmul.f32 %v504, %v504
        %v618 = vmul.f32 %v507, %v507
        %v619 = vmul.f32 %v509, %v509
        %v620 = vmul.f32 %v512, %v512
        %v621 = vmul.f32 %v514, %v514
        %v622 = vadd.f32 %v590, %v591
        %v623 = vadd.f32 %v622, %v592
        %v624 = vadd.f32 %v623, %v593
        %v625 = vadd.f32 %v624, %v594
        %v626 = vadd.f32 %v625, %v595
        %v627 = vadd.f32 %v626, %v596
        %v628 = vadd.f32 %v627, %v597
        %v629 = vadd.f32 %v628, %v598
        %v630 = vadd.f32 %v629, %v599
        %v631 = vadd.f32 %v630, %v600
        %v632 = vadd.f32 %v631, %v601
        %v633 = vadd.f32 %v632, %v602
        %v634 = vadd.f32 %v633, %v603
        %v635 = vadd.f32 %v634, %v604
        %v636 = vadd.f32 %v635, %v605
        %v637 = vadd.f32 %v636, %v606
        %v638 = vadd.f32 %v637, %v607
        %v639 = vadd.f32 %v638, %v608
        %v640 = vadd.f32 %v639, %v609
        %v641 = vadd.f32 %v640, %v610
        %v642 = vadd.f32 %v641, %v611
        %v643 = vadd.f32 %v642, %v612
        %v644 = vadd.f32 %v643, %v613
        %v645 = vadd.f32 %v644, %v614
        %v646 = vadd.f32 %v645, %v615
        %v647 = vadd.f32 %v646, %v616
        %v648 = vadd.f32 %v647, %v617
        %v649 = vadd.f32 %v648, %v618
        %v650 = vadd.f32 %v649, %v619
        %v651 = vadd.f32 %v650, %v620
        %v652 = vadd.f32 %v651, %v621
        %v653 = vrot.slane %v652, 4
        %v654 = vadd.f32 %v652, %v653
        %v655 = vrot.slane %v654, 2
        %v656 = vadd.f32 %v654, %v655
        %v657 = vrot.slane %v656, 1
        %v658 = vadd.f32 %v656, %v657
        %v659 = vld [vmem:[#allocation8] sm:$0x3]
        %vm660 = vcmask 1040384
        %v661 = vsel %vm660, %v589, %v658
        %v662 = vadd.f32 %v659, %v661
        %663 = vst [vmem:[#allocation8] sm:$0x3] %v662
        %s664 = sand.u32 %s97, 1
        %s665 = scalar_lea.sflag [#allocation4], %s664
        %s666 = sand.u32 %s97, 1
        %s667 = smul.addr %s666, 256
        %s668 = scalar_lea.vmem [#allocation7], %s667
        // Predicated region
        $region41: #{tpu_custom_call.1} parent=27 // pred_check
          %p669 = pneg %p107
        $region42: #{tpu_custom_call.1} parent=27 // pred_check_branch
          %671 = sbr.rel (%p669) target = $region44
        $region43: #{tpu_custom_call.1} parent=27 // pred_region
          %s672 = smul.u32 32, %s28
          %674 = vsyncadd %s665, 0
          %s675 = sadd.s32 %s27, %s672
          %s676 = smul.addr %s675, 8
          %s677 = scalar_lea.hbm %s2, %s676
          %s678 = sshll.u32 %s668, 4
          %s679 = int_to_ptr.vmem [resolvable:$true] %s678
          %s680 = sshll.u32 %s677, 4
          %s681 = int_to_ptr.hbm [resolvable:$true] %s680
          %686 = dma.vmem_to_hbm [thread:$0]  %s679, 4096, %s681, %s665, 128, 128, 8
        $region44: #{tpu_custom_call.1} parent=27 // pred_fallthru
          _
        // Predicated region
        $region45: #{tpu_custom_call.1} parent=27 // pred_check
          %p687 = pneg %p133
        $region46: #{tpu_custom_call.1} parent=27 // pred_check_branch
          %689 = sbr.rel (%p687) target = $region48
        $region47: #{tpu_custom_call.1} parent=27 // pred_region
          %691 = vsyncadd [#allocation9], 0
          %s692 = smul.addr %s27, 2
          %s693 = scalar_lea.hbm %s3, %s692
          %s695 = sshll.u32 [#allocation8], 4
          %s696 = int_to_ptr.vmem [resolvable:$true] %s695
          %s697 = sshll.u32 %s693, 4
          %s698 = int_to_ptr.hbm [resolvable:$true] %s697
          %700 = dma.vmem_to_hbm [thread:$0]  %s696, 32, %s698, [#allocation9]
        $region48: #{tpu_custom_call.1} parent=27 // pred_fallthru
          _
        // Predicated region
        $region49: #{tpu_custom_call.1} parent=27 // pred_check
          %p701 = pneg %p133
        $region50: #{tpu_custom_call.1} parent=27 // pred_check_branch
          %703 = sbr.rel (%p701) target = $region52
        $region51: #{tpu_custom_call.1} parent=27 // pred_region
          %705 = dma.done [#allocation9], 32
        $region52: #{tpu_custom_call.1} parent=27 // pred_fallthru
          _
      $region28: #{tpu_custom_call.1} parent=5 // pred_fallthru
        _
      %p706 = scmp.le.s32.totalorder 2, %s18
      // Predicated region
      $region53: #{tpu_custom_call.1} parent=5 // pred_check
        %p707 = pneg %p706
      $region54: #{tpu_custom_call.1} parent=5 // pred_check_branch
        %709 = sbr.rel (%p707) target = $region56
      $region55: #{tpu_custom_call.1} parent=5 // pred_region
        %s710 = ssub.s32 %s18, 2
        // Predicated region
        $region57: #{tpu_custom_call.1} parent=55 // pred_check
          %p711 = pneg %p113
        $region58: #{tpu_custom_call.1} parent=55 // pred_check_branch
          %713 = sbr.rel (%p711) target = $region60
        $region59: #{tpu_custom_call.1} parent=55 // pred_region
          %s714 = sand.u32 %s98, 1
          %s715 = scalar_lea.sflag [#allocation4], %s714
          %s716 = sand.u32 %s98, 1
          %s717 = smul.addr %s716, 256
          %s718 = scalar_lea.vmem [#allocation7], %s717
          %720 = dma.done %s715, 4096
        $region60: #{tpu_custom_call.1} parent=55 // pred_fallthru
          _
      $region56: #{tpu_custom_call.1} parent=5 // pred_fallthru
        _
    $region6: #{tpu_custom_call.1} parent=1 // loop_footer
      %s22 = sadd.s32 1, %s18
    $region7: #{tpu_custom_call.1} parent=1 // loop_footer_branch
      %17 = sbr.rel target = $region3
    $region8: #{tpu_custom_call.1} parent=1 // loop_exit
      _
    %721 = vsyncpa [#allocation3], 1
    %s722 = scalar_lea.sflag [#allocation3], 1
    %723 = vsyncpa %s722, 1
    %724 = vsyncpa [#allocation6], 1
    %725 = vsyncpa [#allocation4], 1
    %s726 = scalar_lea.sflag [#allocation4], 1
    %727 = vsyncpa %s726, 1
    %728 = vsyncpa [#allocation9], 1

</llo_original>
